<compile_context>
chip_gen: v5e
topology: v5e:2x2
jax: 0.10.0
libtpu: 0.0.40
codegen_flags: <defaults>
</compile_context>

<pallas_src>
import functools

import jax
import jax.numpy as jnp
from jax.experimental import pallas as pl
from jax.experimental.pallas import tpu as pltpu

LEAKY_SLOPE = 0.01
BN_EPS = 1e-5
LANE = 128
SUBLANE = 8


def _round_up(x, m):
    return ((x + m - 1) // m) * m


def _leaky_relu(x):
    # one vmul + one vmax instead of compare + select
    return jnp.maximum(x, LEAKY_SLOPE * x)


# ----------------------------------------------------------------------------
# Kernel 1: BatchNorm batch statistics (mean, 1/sqrt(var+eps)), accumulated
# over batch tiles. Output blocks are reused across the grid as accumulators.
# ----------------------------------------------------------------------------
def _bn_stats_kernel(x_ref, mean_ref, rstd_ref, *, inv_b):
    i = pl.program_id(0)

    @pl.when(i == 0)
    def _():
        mean_ref[...] = jnp.zeros_like(mean_ref)
        rstd_ref[...] = jnp.zeros_like(rstd_ref)

    x = x_ref[...]
    mean_ref[...] += jnp.sum(x, axis=0, keepdims=True)        # running sum
    rstd_ref[...] += jnp.sum(x * x, axis=0, keepdims=True)    # running sum of squares

    @pl.when(i == pl.num_programs(0) - 1)
    def _():
        mean = mean_ref[...] * inv_b
        var = rstd_ref[...] * inv_b - mean * mean              # one-pass variance
        mean_ref[...] = mean
        rstd_ref[...] = jax.lax.rsqrt(var + BN_EPS)


# ----------------------------------------------------------------------------
# Kernel 2: normalized input -> 3-layer MLP. Grid over batch tiles ("parallel").
# Weights are bf16 (MXU operands), accumulation and elementwise math are f32.
# ----------------------------------------------------------------------------
def _policy_kernel(x_ref, mean_ref, rstd_ref,
                   w1_ref, b1_ref, w2_ref, b2_ref, w3_ref, b3_ref, o_ref):
    # BatchNorm1d(affine=False), training-mode batch statistics (f32 elementwise).
    inp = (x_ref[...] - mean_ref[...]) * rstd_ref[...]

    # fc1 + leaky_relu (bf16 MXU operands, f32 accumulation)
    h1 = jnp.dot(inp.astype(jnp.bfloat16), w1_ref[...],
                 preferred_element_type=jnp.float32) + b1_ref[...]
    h1 = _leaky_relu(h1)

    # fc2 + leaky_relu
    h2 = jnp.dot(h1.astype(jnp.bfloat16), w2_ref[...],
                 preferred_element_type=jnp.float32) + b2_ref[...]
    h2 = _leaky_relu(h2)

    # fc3 (no nonlinearity) -> lane-dense padded output block
    out = jnp.dot(h2.astype(jnp.bfloat16), w3_ref[...],
                  preferred_element_type=jnp.float32) + b3_ref[...]
    o_ref[...] = out.astype(o_ref.dtype)


# ----------------------------------------------------------------------------
# Wrapper: pad to lane/sublane-aligned shapes, run stats + MLP kernels, slice.
# ----------------------------------------------------------------------------
def base_policy_forward(x, w1, b1, w2, b2, w3, b3, *, block_batch=256):
    f32, bf16 = jnp.float32, jnp.bfloat16
    B, input_dim = x.shape
    hidden_dim = w1.shape[1]
    out_dim = w3.shape[1]

    d_pad = _round_up(input_dim, LANE)
    h_pad = _round_up(hidden_dim, LANE)
    o_pad = _round_up(out_dim, LANE)
    tb = min(block_batch, _round_up(B, SUBLANE))   # batch tile (multiple of 8)
    b_pad = _round_up(B, tb)
    n_tiles = b_pad // tb

    # Zero-pad everything to lane-dense shapes (zeros are absorbed by the math).
    xp = jnp.zeros((b_pad, d_pad), f32).at[:B, :input_dim].set(x.astype(f32))
    w1p = jnp.zeros((d_pad, h_pad), bf16).at[:input_dim, :hidden_dim].set(w1.astype(bf16))
    w2p = jnp.zeros((h_pad, h_pad), bf16).at[:hidden_dim, :hidden_dim].set(w2.astype(bf16))
    w3p = jnp.zeros((h_pad, o_pad), bf16).at[:hidden_dim, :out_dim].set(w3.astype(bf16))
    b1p = jnp.zeros((1, h_pad), f32).at[:, :hidden_dim].set(b1.astype(f32).reshape(1, -1))
    b2p = jnp.zeros((1, h_pad), f32).at[:, :hidden_dim].set(b2.astype(f32).reshape(1, -1))
    b3p = jnp.zeros((1, o_pad), f32).at[:, :out_dim].set(b3.astype(f32).reshape(1, -1))

    # ---- pass 1: global batch statistics (accumulated over batch tiles) ----
    mean, rstd = pl.pallas_call(
        functools.partial(_bn_stats_kernel, inv_b=1.0 / B),
        out_shape=(jax.ShapeDtypeStruct((1, d_pad), f32),
                   jax.ShapeDtypeStruct((1, d_pad), f32)),
        grid=(n_tiles,),
        in_specs=[pl.BlockSpec((tb, d_pad), lambda i: (i, 0))],
        out_specs=(pl.BlockSpec((1, d_pad), lambda i: (0, 0)),
                   pl.BlockSpec((1, d_pad), lambda i: (0, 0))),
        compiler_params=pltpu.CompilerParams(
            dimension_semantics=("arbitrary",),
            vmem_limit_bytes=32 * 1024 * 1024),
    )(xp)

    # ---- pass 2: normalized input -> MLP, batch-parallel grid ----
    flops = 2 * b_pad * (d_pad * h_pad + h_pad * h_pad + h_pad * o_pad)
    bytes_accessed = (xp.size * 4 + (w1p.size + w2p.size + w3p.size) * 2
                      + (b1p.size + b2p.size + b3p.size + 2 * d_pad) * 4
                      + b_pad * o_pad * 4)

    def const(a):
        return pl.BlockSpec(a.shape, lambda i: (0,) * a.ndim)

    out_pad = pl.pallas_call(
        _policy_kernel,
        out_shape=jax.ShapeDtypeStruct((b_pad, o_pad), f32),
        grid=(n_tiles,),
        in_specs=[pl.BlockSpec((tb, d_pad), lambda i: (i, 0)),
                  const(mean), const(rstd),
                  const(w1p), const(b1p),
                  const(w2p), const(b2p),
                  const(w3p), const(b3p)],
        out_specs=pl.BlockSpec((tb, o_pad), lambda i: (i, 0)),
        compiler_params=pltpu.CompilerParams(
            dimension_semantics=("parallel",),
            vmem_limit_bytes=32 * 1024 * 1024),
        cost_estimate=pl.CostEstimate(flops=flops, transcendentals=0,
                                      bytes_accessed=bytes_accessed),
    )(xp, mean, rstd, w1p, b1p, w2p, b2p, w3p, b3p)

    return out_pad[:B, :out_dim]


# ----------------------------------------------------------------------------
# Parameter init mirroring torch.nn.Linear's U(-1/sqrt(fan_in), 1/sqrt(fan_in)).
# ----------------------------------------------------------------------------
def init_params(key, input_dim, out_dim, hidden_dim):
    ks = jax.random.split(key, 6)

    def lin(kw, kb, fan_in, fan_out):
        bound = 1.0 / jnp.sqrt(jnp.float32(fan_in))
        w = jax.random.uniform(kw, (fan_in, fan_out), jnp.float32, -bound, bound)
        b = jax.random.uniform(kb, (1, fan_out), jnp.float32, -bound, bound)
        return w, b

    w1, b1 = lin(ks[0], ks[1], input_dim, hidden_dim)
    w2, b2 = lin(ks[2], ks[3], hidden_dim, hidden_dim)
    w3, b3 = lin(ks[4], ks[5], hidden_dim, out_dim)
    return w1, b1, w2, b2, w3, b3


# ----------------------------------------------------------------------------
# Pure-JAX references.
# ----------------------------------------------------------------------------
def reference_forward_f32(x, w1, b1, w2, b2, w3, b3):
    mean = jnp.mean(x, axis=0, keepdims=True)
    var = jnp.mean(x * x, axis=0, keepdims=True) - mean * mean
    inp = (x - mean) * jax.lax.rsqrt(var + BN_EPS)
    h1 = _leaky_relu(inp @ w1 + b1)
    h2 = _leaky_relu(h1 @ w2 + b2)
    return h2 @ w3 + b3


def reference_forward_bf16_dots(x, w1, b1, w2, b2, w3, b3):
    bf16 = jnp.bfloat16
    dot = lambda a, b: jnp.dot(a.astype(bf16), b.astype(bf16),
                               preferred_element_type=jnp.float32)
    mean = jnp.mean(x, axis=0, keepdims=True)
    var = jnp.mean(x * x, axis=0, keepdims=True) - mean * mean
    inp = (x - mean) * jax.lax.rsqrt(var + BN_EPS)
    h1 = _leaky_relu(dot(inp, w1) + b1)
    h2 = _leaky_relu(dot(h1, w2) + b2)
    return dot(h2, w3) + b3


if __name__ == "__main__":
    input_dim, out_dim, hidden_dim = 16, 8, 64
    batch = 8

    key = jax.random.PRNGKey(0)
    kx, kp = jax.random.split(key)
    x = jax.random.normal(kx, (batch, input_dim), jnp.float32)
    params = init_params(kp, input_dim, out_dim, hidden_dim)

    out = base_policy_forward(x, *params)
    out = jax.block_until_ready(out)
    assert out.shape == (batch, out_dim)

    ref_bf16 = reference_forward_bf16_dots(x, *params)
    ref_f32 = reference_forward_f32(x, *params)
    assert jnp.allclose(out, ref_bf16, atol=5e-3, rtol=5e-3), \
        "mismatch vs bf16-dot reference"
    assert jnp.allclose(out, ref_f32, atol=3e-2, rtol=3e-2), \
        "drift vs f32 reference too large"

    print("KERNEL_OK")
</pallas_src>

<mosaic_0001>
module attributes {stable_mosaic.version = 11 : i64} {
  func.func @_bn_stats_kernel(%arg0: i32, %arg1: memref<8x128xf32, #tpu.memory_space<vmem>>, %arg2: memref<1x128xf32, #tpu.memory_space<vmem>>, %arg3: memref<1x128xf32, #tpu.memory_space<vmem>>) attributes {dimension_semantics = [#tpu.dimension_semantics<arbitrary>], iteration_bounds = array<i64: 1>, scalar_prefetch = 0 : i64, scratch_operands = 0 : i64, tpu.core_type = #tpu.core_type<tc>, window_params = [{transform_indices = @transform_0, window_bounds = array<i64: 8, 128>}, {pipeline_mode = #tpu.pipeline_mode<synchronous>, transform_indices = @transform_1, window_bounds = array<i64: 1, 128>}, {pipeline_mode = #tpu.pipeline_mode<synchronous>, transform_indices = @transform_2, window_bounds = array<i64: 1, 128>}]} {
    %c0_i32 = arith.constant 0 : i32
    %0 = arith.cmpi eq, %arg0, %c0_i32 : i32
    %1 = arith.extui %0 : i1 to i32
    %c0_i32_0 = arith.constant 0 : i32
    %2 = arith.cmpi ne, %1, %c0_i32_0 : i32
    scf.if %2 {
      %cst_13 = arith.constant 0.000000e+00 : f32
      %18 = vector.broadcast %cst_13 : f32 to vector<1x128xf32>
      %c0_14 = arith.constant 0 : index
      %c0_15 = arith.constant 0 : index
      %19 = vector.load %arg2[%c0_14, %c0_15] : memref<1x128xf32, #tpu.memory_space<vmem>>, vector<1x128xf32>
      tpu.vector_store %arg2[%c0_14, %c0_15], %18 {strides = array<i32>} : memref<1x128xf32, #tpu.memory_space<vmem>>, vector<1x128xf32>,
      %cst_16 = arith.constant 0.000000e+00 : f32
      %20 = vector.broadcast %cst_16 : f32 to vector<1x128xf32>
      %c0_17 = arith.constant 0 : index
      %c0_18 = arith.constant 0 : index
      %21 = vector.load %arg3[%c0_17, %c0_18] : memref<1x128xf32, #tpu.memory_space<vmem>>, vector<1x128xf32>
      tpu.vector_store %arg3[%c0_17, %c0_18], %20 {strides = array<i32>} : memref<1x128xf32, #tpu.memory_space<vmem>>, vector<1x128xf32>,
    } else {
    }
    %c0 = arith.constant 0 : index
    %c0_1 = arith.constant 0 : index
    %3 = vector.load %arg1[%c0, %c0_1] : memref<8x128xf32, #tpu.memory_space<vmem>>, vector<8x128xf32>
    %c0_2 = arith.constant 0 : index
    %c0_3 = arith.constant 0 : index
    %4 = vector.load %arg2[%c0_2, %c0_3] : memref<1x128xf32, #tpu.memory_space<vmem>>, vector<1x128xf32>
    %cst = arith.constant dense<0.000000e+00> : vector<128xf32>
    %5 = vector.multi_reduction <add>, %3, %cst [0] : vector<8x128xf32> to vector<128xf32>
    %6 = vector.shape_cast %5 : vector<128xf32> to vector<1x128xf32>
    %7 = arith.addf %4, %6 : vector<1x128xf32>
    %c0_4 = arith.constant 0 : index
    %c0_5 = arith.constant 0 : index
    %8 = vector.load %arg2[%c0_4, %c0_5] : memref<1x128xf32, #tpu.memory_space<vmem>>, vector<1x128xf32>
    tpu.vector_store %arg2[%c0_4, %c0_5], %7 {strides = array<i32>} : memref<1x128xf32, #tpu.memory_space<vmem>>, vector<1x128xf32>,
    %c0_6 = arith.constant 0 : index
    %c0_7 = arith.constant 0 : index
    %9 = vector.load %arg3[%c0_6, %c0_7] : memref<1x128xf32, #tpu.memory_space<vmem>>, vector<1x128xf32>
    %10 = arith.mulf %3, %3 : vector<8x128xf32>
    %cst_8 = arith.constant dense<0.000000e+00> : vector<128xf32>
    %11 = vector.multi_reduction <add>, %10, %cst_8 [0] : vector<8x128xf32> to vector<128xf32>
    %12 = vector.shape_cast %11 : vector<128xf32> to vector<1x128xf32>
    %13 = arith.addf %9, %12 : vector<1x128xf32>
    %c0_9 = arith.constant 0 : index
    %c0_10 = arith.constant 0 : index
    %14 = vector.load %arg3[%c0_9, %c0_10] : memref<1x128xf32, #tpu.memory_space<vmem>>, vector<1x128xf32>
    tpu.vector_store %arg3[%c0_9, %c0_10], %13 {strides = array<i32>} : memref<1x128xf32, #tpu.memory_space<vmem>>, vector<1x128xf32>,
    %c0_i32_11 = arith.constant 0 : i32
    %15 = arith.cmpi eq, %arg0, %c0_i32_11 : i32
    %16 = arith.extui %15 : i1 to i32
    %c0_i32_12 = arith.constant 0 : i32
    %17 = arith.cmpi ne, %16, %c0_i32_12 : i32
    scf.if %17 {
      %c0_13 = arith.constant 0 : index
      %c0_14 = arith.constant 0 : index
      %18 = vector.load %arg2[%c0_13, %c0_14] : memref<1x128xf32, #tpu.memory_space<vmem>>, vector<1x128xf32>
      %cst_15 = arith.constant 1.250000e-01 : f32
      %19 = vector.broadcast %cst_15 : f32 to vector<1x128xf32>
      %20 = arith.mulf %18, %19 : vector<1x128xf32>
      %c0_16 = arith.constant 0 : index
      %c0_17 = arith.constant 0 : index
      %21 = vector.load %arg3[%c0_16, %c0_17] : memref<1x128xf32, #tpu.memory_space<vmem>>, vector<1x128xf32>
      %cst_18 = arith.constant 1.250000e-01 : f32
      %22 = vector.broadcast %cst_18 : f32 to vector<1x128xf32>
      %23 = arith.mulf %21, %22 : vector<1x128xf32>
      %24 = arith.mulf %20, %20 : vector<1x128xf32>
      %25 = arith.subf %23, %24 : vector<1x128xf32>
      %c0_19 = arith.constant 0 : index
      %c0_20 = arith.constant 0 : index
      %26 = vector.load %arg2[%c0_19, %c0_20] : memref<1x128xf32, #tpu.memory_space<vmem>>, vector<1x128xf32>
      tpu.vector_store %arg2[%c0_19, %c0_20], %20 {strides = array<i32>} : memref<1x128xf32, #tpu.memory_space<vmem>>, vector<1x128xf32>,
      %cst_21 = arith.constant 9.99999974E-6 : f32
      %27 = vector.broadcast %cst_21 : f32 to vector<1x128xf32>
      %28 = arith.addf %25, %27 : vector<1x128xf32>
      %29 = math.rsqrt %28 : vector<1x128xf32>
      %c0_22 = arith.constant 0 : index
      %c0_23 = arith.constant 0 : index
      %30 = vector.load %arg3[%c0_22, %c0_23] : memref<1x128xf32, #tpu.memory_space<vmem>>, vector<1x128xf32>
      tpu.vector_store %arg3[%c0_22, %c0_23], %29 {strides = array<i32>} : memref<1x128xf32, #tpu.memory_space<vmem>>, vector<1x128xf32>,
    } else {
    }
    return
  }
  func.func @transform_0(%arg0: i32) -> (i32, i32) {
    %c0_i32 = arith.constant 0 : i32
    %c0_i32_0 = arith.constant 0 : i32
    return %arg0, %c0_i32 : i32, i32
  }
  func.func @transform_1(%arg0: i32) -> (i32, i32) {
    %c0_i32 = arith.constant 0 : i32
    %c0_i32_0 = arith.constant 0 : i32
    %c0_i32_1 = arith.constant 0 : i32
    return %c0_i32, %c0_i32_0 : i32, i32
  }
  func.func @transform_2(%arg0: i32) -> (i32, i32) {
    %c0_i32 = arith.constant 0 : i32
    %c0_i32_0 = arith.constant 0 : i32
    %c0_i32_1 = arith.constant 0 : i32
    return %c0_i32, %c0_i32_0 : i32, i32
  }
}

</mosaic_0001>

<llo_original>
// kernel: tpu_custom_call.1
$region0: #{tpu_custom_call.1}
  #allocation0 [shape = 'u32[]', space=smem, size = 0x4, offset = 0x4, fixed_abs, tag = 'smem constant byte address 0x4 - core index']
  #allocation1 [shape = 'u32[72,128]{1,0:T(1,128)}', space=vmem, size = 0x9000, scoped, tag = 'internal scratch']
  %s0 = inlined_call_operand.hbm [shape: f32[8,128], index: 0, kind: input, shape index: {}]
  %s1 = inlined_call_operand.hbm [shape: f32[1,128], index: 1, kind: output, shape index: {0}]
  %s2 = inlined_call_operand.hbm [shape: f32[1,128], index: 2, kind: output, shape index: {1}]
  %3 = xla_tuple %s1, %s2
  %s4 = sld [smem:[#allocation0]]
  $region34: #{tpu_custom_call.1} parent=0
    _
  %s6 = ssub.s32 1, %s4
  %s7 = scalar_select 0, %s6, %s4
  $region1: #{tpu_custom_call.1} parent=0
    #allocation2 [shape = 'u8[4096]{0}', space=vmem, size = 0x1000, scoped, tag = 'input window, operand 0, single buffered']
    #allocation3 [shape = 's32[1]{0}', space=sflag, size = 0x4, scoped, tag = 'scoped memory for tpu_custom_call.1']
    #allocation4 [shape = 's32[1]{0}', space=sflag, size = 0x4, scoped, tag = 'scoped memory for tpu_custom_call.1']
    #allocation5 [shape = 'u8[512]{0}', space=vmem, size = 0x400, scoped, tag = 'output window, operand 0, single buffered']
    #allocation6 [shape = 'u8[512]{0}', space=vmem, size = 0x400, scoped, tag = 'output window, operand 1, single buffered']
    #allocation7 [shape = 's32[1]{0}', space=sflag, size = 0x4, scoped, tag = 'scoped memory for tpu_custom_call.1']
    %8 = vsyncpa [#allocation3], 0
    %9 = vsyncpa [#allocation4], 0
    %10 = vsyncpa [#allocation7], 0
    // Predicated region
    $region2: #{tpu_custom_call.1} parent=1 // pred_check
      _
    $region3: #{tpu_custom_call.1} parent=1 // pred_check_branch
      %12 = sbr.rel (0) target = $region5
    $region4: #{tpu_custom_call.1} parent=1 // pred_region
      %14 = vsyncadd [#allocation3], 0
      %s16 = sshll.u32 %s0, 4
      %s17 = int_to_ptr.hbm [resolvable:$true] %s16
      %s18 = sshll.u32 [#allocation2], 4
      %s19 = int_to_ptr.vmem [resolvable:$true] %s18
      %21 = dma.hbm_to_vmem [thread:$0]  %s17, 128, %s19, [#allocation3]
    $region5: #{tpu_custom_call.1} parent=1 // pred_fallthru
      _
    // Predicated region
    $region6: #{tpu_custom_call.1} parent=1 // pred_check
      _
    $region7: #{tpu_custom_call.1} parent=1 // pred_check_branch
      %23 = sbr.rel (0) target = $region9
    $region8: #{tpu_custom_call.1} parent=1 // pred_region
      %25 = dma.done [#allocation3], 128
    $region9: #{tpu_custom_call.1} parent=1 // pred_fallthru
      _
    %p26 = scmp.eq.s32.totalorder 0, 0
    // Predicated region
    $region10: #{tpu_custom_call.1} parent=1 // pred_check
      %p27 = pneg %p26
    $region11: #{tpu_custom_call.1} parent=1 // pred_check_branch
      %29 = sbr.rel (%p27) target = $region13
    $region12: #{tpu_custom_call.1} parent=1 // pred_region
      %30 = vst [vmem:[#allocation5] sm:$0x1] 0.0
      %31 = vst [vmem:[#allocation6] sm:$0x1] 0.0
    $region13: #{tpu_custom_call.1} parent=1 // pred_fallthru
      _
    %v32 = vld [vmem:[#allocation2] sm:$0xff]
    %v33 = vld [vmem:[#allocation5] sm:$0x1]
    %v34 = vrot.slane %v32, 4
    %v35 = vadd.f32 %v32, %v34
    %v36 = vrot.slane %v35, 2
    %v37 = vadd.f32 %v35, %v36
    %v38 = vrot.slane %v37, 1
    %v39 = vadd.f32 %v37, %v38
    %v40 = vadd.f32 %v33, %v39
    %41 = vst [vmem:[#allocation5] sm:$0x1] %v40
    %v42 = vld [vmem:[#allocation6] sm:$0x1]
    %v43 = vmul.f32 %v32, %v32
    %v44 = vrot.slane %v43, 4
    %v45 = vadd.f32 %v43, %v44
    %v46 = vrot.slane %v45, 2
    %v47 = vadd.f32 %v45, %v46
    %v48 = vrot.slane %v47, 1
    %v49 = vadd.f32 %v47, %v48
    %v50 = vadd.f32 %v42, %v49
    %51 = vst [vmem:[#allocation6] sm:$0x1] %v50
    // Predicated region
    $region14: #{tpu_custom_call.1} parent=1 // pred_check
      %p52 = pneg %p26
    $region15: #{tpu_custom_call.1} parent=1 // pred_check_branch
      %54 = sbr.rel (%p52) target = $region17
    $region16: #{tpu_custom_call.1} parent=1 // pred_region
      %v55 = vld [vmem:[#allocation5] sm:$0x1]
      %v56 = vmul.f32 %v55, 0.125
      %v57 = vld [vmem:[#allocation6] sm:$0x1]
      %v58 = vmul.f32 %v57, 0.125
      %v59 = vmul.f32 %v56, %v56
      %v60 = vsub.f32 %v58, %v59
      %61 = vst [vmem:[#allocation5] sm:$0x1] %v56
      %v62 = vadd.f32 %v60, 1e-05
      %v63 = vrsqrt.pop %v62
      %v64 = vmul.f32 %v63, %v62
      %v65 = vmul.f32 %v64, %v63
      %v66 = vmul.f32 0.5, %v65
      %v67 = vsub.f32 1.5, %v66
      %v68 = vmul.f32 %v63, %v67
      %vm69 = vweird.f32 %v62
      %vm70 = vweird.f32 %v63
      %vm71 = vmor %vm69, %vm70
      %v72 = vsel %vm71, %v63, %v68
      %73 = vst [vmem:[#allocation6] sm:$0x1] %v72
    $region17: #{tpu_custom_call.1} parent=1 // pred_fallthru
      _
    // Predicated region
    $region18: #{tpu_custom_call.1} parent=1 // pred_check
      _
    $region19: #{tpu_custom_call.1} parent=1 // pred_check_branch
      %75 = sbr.rel (0) target = $region21
    $region20: #{tpu_custom_call.1} parent=1 // pred_region
      %77 = vsyncadd [#allocation4], 0
      %s79 = sshll.u32 [#allocation5], 4
      %s80 = int_to_ptr.vmem [resolvable:$true] %s79
      %s81 = sshll.u32 %s1, 4
      %s82 = int_to_ptr.hbm [resolvable:$true] %s81
      %84 = dma.vmem_to_hbm [thread:$0]  %s80, 16, %s82, [#allocation4]
    $region21: #{tpu_custom_call.1} parent=1 // pred_fallthru
      _
    // Predicated region
    $region22: #{tpu_custom_call.1} parent=1 // pred_check
      _
    $region23: #{tpu_custom_call.1} parent=1 // pred_check_branch
      %86 = sbr.rel (0) target = $region25
    $region24: #{tpu_custom_call.1} parent=1 // pred_region
      %88 = vsyncadd [#allocation7], 0
      %s90 = sshll.u32 [#allocation6], 4
      %s91 = int_to_ptr.vmem [resolvable:$true] %s90
      %s92 = sshll.u32 %s2, 4
      %s93 = int_to_ptr.hbm [resolvable:$true] %s92
      %95 = dma.vmem_to_hbm [thread:$0]  %s91, 16, %s93, [#allocation7]
    $region25: #{tpu_custom_call.1} parent=1 // pred_fallthru
      _
    // Predicated region
    $region26: #{tpu_custom_call.1} parent=1 // pred_check
      _
    $region27: #{tpu_custom_call.1} parent=1 // pred_check_branch
      %97 = sbr.rel (0) target = $region29
    $region28: #{tpu_custom_call.1} parent=1 // pred_region
      %99 = dma.done [#allocation4], 16
    $region29: #{tpu_custom_call.1} parent=1 // pred_fallthru
      _
    // Predicated region
    $region30: #{tpu_custom_call.1} parent=1 // pred_check
      _
    $region31: #{tpu_custom_call.1} parent=1 // pred_check_branch
      %101 = sbr.rel (0) target = $region33
    $region32: #{tpu_custom_call.1} parent=1 // pred_region
      %103 = dma.done [#allocation7], 16
    $region33: #{tpu_custom_call.1} parent=1 // pred_fallthru
      _
    %104 = vsyncpa [#allocation3], 1
    %105 = vsyncpa [#allocation4], 1
    %106 = vsyncpa [#allocation7], 1

</llo_original>
